<compile_context>
chip_gen: v7x
topology: tpu7x:2x2x1
jax: 0.10.0
libtpu: 0.0.40
codegen_flags: <defaults>
</compile_context>

<pallas_src>
import functools

import jax
import jax.numpy as jnp
from jax.experimental import pallas as pl
from jax.experimental.pallas import tpu as pltpu

_LANES = 128
_SUBLANES = 8


def _cls_loss_kernel(pred_ref, iou_ref, sum_ref, cnt_ref, *,
                     pos_lb, neg_ub, n_valid, block_rows, bpc):
    c = pl.program_id(0)                   # parallel slice (TensorCore shard)
    i = pl.program_id(1)                   # reduction step within the slice
    g = c * bpc + i                        # global (unclamped) block index
    block_elems = block_rows * _LANES
    sub = block_rows // _SUBLANES

    # Per-slice accumulators live directly in the output blocks, which stay
    # resident in VMEM across the "arbitrary" reduction axis.
    @pl.when(i == 0)
    def _init():
        sum_ref[...] = jnp.zeros_like(sum_ref)
        cnt_ref[...] = jnp.zeros_like(cnt_ref)

    # Upcast in VMEM (inputs may be bf16 to halve HBM bytes).
    p = pred_ref[...].astype(jnp.float32)        # (block_rows, 128)
    iou = iou_ref[...].astype(jnp.float32)       # (block_rows, 128)

    def accumulate(valid):
        pos = iou >= pos_lb                      # label-1 samples
        neg = iou <= neg_ub                      # label-0 samples
        if valid is not None:
            pos = jnp.logical_and(valid, pos)
            neg = jnp.logical_and(valid, neg)
        if pos_lb > neg_ub:
            # Disjoint pos/neg sets: one log per element (halves EUP load).
            sel = jnp.logical_or(pos, neg)
            arg = jnp.where(pos, p, 1.0 - p)
            nll = -jnp.maximum(jnp.log(arg), -100.0)        # BCELoss clamp
            per = jnp.where(sel, nll, 0.0)
            cnt = jnp.where(sel, 1.0, 0.0)
        else:
            # Overlapping thresholds: element may contribute both terms.
            log_p = jnp.maximum(jnp.log(p), -100.0)
            log_1mp = jnp.maximum(jnp.log(1.0 - p), -100.0)
            per = jnp.where(pos, -log_p, 0.0) + jnp.where(neg, -log_1mp, 0.0)
            cnt = jnp.where(pos, 1.0, 0.0) + jnp.where(neg, 1.0, 0.0)
        # (block_rows,128) -> (sub,8,128) is layout-preserving; the axis-0 sum
        # is plain vreg-wise VPU adds (no per-step cross-lane XLU reduction).
        sum_ref[...] += jnp.sum(per.reshape(sub, _SUBLANES, _LANES),
                                axis=0, keepdims=True)
        cnt_ref[...] += jnp.sum(cnt.reshape(sub, _SUBLANES, _LANES),
                                axis=0, keepdims=True)

    # Only the tail block (and fully-out-of-range duplicate blocks, which the
    # index_map clamps to a valid block) needs the element-validity mask.
    needs_mask = (g + 1) * block_elems > n_valid

    @pl.when(jnp.logical_not(needs_mask))
    def _interior():
        accumulate(None)

    @pl.when(needs_mask)
    def _tail():
        row_ids = jax.lax.broadcasted_iota(jnp.int32, (block_rows, _LANES), 0)
        col_ids = jax.lax.broadcasted_iota(jnp.int32, (block_rows, _LANES), 1)
        flat_idx = g * block_elems + row_ids * _LANES + col_ids
        accumulate(flat_idx < n_valid)


def _reference_loss(pred, iou, config):
    """Pure-JAX reference matching the PyTorch module (also small-N path)."""
    pred = jnp.reshape(pred, (-1,)).astype(jnp.float32)
    iou = jnp.reshape(iou, (-1,)).astype(jnp.float32)
    pos = iou >= config["positive_cls_lb"]
    neg = iou <= config["negative_cls_ub"]
    log_p = jnp.maximum(jnp.log(pred), -100.0)
    log_1mp = jnp.maximum(jnp.log(1.0 - pred), -100.0)
    per = jnp.where(pos, -log_p, 0.0) + jnp.where(neg, -log_1mp, 0.0)
    cnt = jnp.sum(pos) + jnp.sum(neg)
    return jnp.where(cnt > 0, jnp.sum(per) / jnp.maximum(cnt, 1), 0.0)


def classification_loss(pred, iou, config, *, block_rows=4096, use_pallas=None):
    """BCE classification loss over IoU-selected proposals (mean reduction).

    pred: (N, 1) or (N,) probabilities (already sigmoid-ed); iou: (N,).
    Returns a scalar float32 loss.
    """
    n = int(pred.shape[0])
    pos_lb = float(config["positive_cls_lb"])
    neg_ub = float(config["negative_cls_ub"])

    if n == 0:
        return jnp.zeros((), jnp.float32)

    # Small-N fast path: a standalone pallas_call is launch/step-overhead
    # dominated for a few KB of data; let XLA fuse the tiny expression.
    if use_pallas is None:
        use_pallas = n >= 32768
    if not use_pallas:
        return _reference_loss(pred, iou, config)

    # Dense (rows, 128) layout.  Pad only to a multiple of 8*128 = 1024
    # elements (zero-copy reshape when N is already aligned); the tail block
    # is discarded in-kernel by the index mask, so no full pad/reshape pass.
    flat_pred = jnp.reshape(pred, (-1,))
    flat_iou = jnp.reshape(iou, (-1,))
    pad = (-n) % (_SUBLANES * _LANES)
    if pad:
        flat_pred = jnp.pad(flat_pred, (0, pad), constant_values=0.5)
        flat_iou = jnp.pad(flat_iou, (0, pad), constant_values=0.0)
    padded_rows = (n + pad) // _LANES
    pred2d = jnp.reshape(flat_pred, (padded_rows, _LANES))
    iou2d = jnp.reshape(flat_iou, (padded_rows, _LANES))

    # 4096 rows -> 2 MiB per f32 input block; double-buffered for both inputs
    # ~8 MiB, inside every generation's scoped-VMEM default while keeping the
    # kernel HBM-bound rather than step-overhead-bound.
    block_rows = max(_SUBLANES, min(block_rows, padded_rows))
    block_rows -= block_rows % _SUBLANES
    block_elems = block_rows * _LANES

    total_blocks = pl.cdiv(padded_rows, block_rows)
    # Two "parallel" slices -> v7x shards the reduction across its two
    # TensorCores; on single-core chips the second slice just runs after the
    # first (negligible overhead).  Skip it when there is only one block.
    num_slices = 2 if total_blocks >= 2 else 1
    bpc = pl.cdiv(total_blocks, num_slices)        # blocks per slice

    def in_map(c, i):
        g = c * bpc + i
        # Clamp so padded / duplicate grid steps still read an in-bounds
        # block; their data is discarded by the in-kernel index mask.
        return (jnp.minimum(g, total_blocks - 1), 0)

    kernel = functools.partial(
        _cls_loss_kernel,
        pos_lb=pos_lb, neg_ub=neg_ub, n_valid=n,
        block_rows=block_rows, bpc=bpc)

    elems = padded_rows * _LANES
    in_bytes = (pred2d.size * pred2d.dtype.itemsize
                + iou2d.size * iou2d.dtype.itemsize)
    out_bytes = 2 * num_slices * _SUBLANES * _LANES * 4
    cost = pl.CostEstimate(
        flops=12 * elems,
        transcendentals=(elems if pos_lb > neg_ub else 2 * elems),
        bytes_accessed=int(in_bytes + out_bytes))

    part_sum, part_cnt = pl.pallas_call(
        kernel,
        out_shape=(
            jax.ShapeDtypeStruct((num_slices, _SUBLANES, _LANES), jnp.float32),
            jax.ShapeDtypeStruct((num_slices, _SUBLANES, _LANES), jnp.float32),
        ),
        grid=(num_slices, bpc),
        in_specs=[
            pl.BlockSpec((block_rows, _LANES), in_map),
            pl.BlockSpec((block_rows, _LANES), in_map),
        ],
        out_specs=(
            pl.BlockSpec((1, _SUBLANES, _LANES), lambda c, i: (c, 0, 0)),
            pl.BlockSpec((1, _SUBLANES, _LANES), lambda c, i: (c, 0, 0)),
        ),
        compiler_params=pltpu.CompilerParams(
            dimension_semantics=("parallel", "arbitrary")),
        cost_estimate=cost,
    )(pred2d, iou2d)

    # Final tiny reduce + guarded divide on a few KB: cheaper than a per-step
    # XLU reduction and needed anyway to combine the per-core partials.
    total = jnp.sum(part_sum)
    count = jnp.sum(part_cnt)
    return jnp.where(count > 0.0, total / jnp.maximum(count, 1.0),
                     jnp.zeros((), jnp.float32))


if __name__ == "__main__":
    config = {"positive_cls_lb": 0.6, "negative_cls_ub": 0.45}
    key = jax.random.PRNGKey(0)
    ks = jax.random.split(key, 6)

    def check(pred, iou, cfg, **kw):
        got = jax.block_until_ready(classification_loss(pred, iou, cfg, **kw))
        want = jax.block_until_ready(_reference_loss(pred, iou, cfg))
        assert jnp.allclose(got, want, rtol=1e-4, atol=1e-6), (got, want)
        return got

    # Case 1: tiny N (module spec shape), forced through the Pallas kernel.
    N = 16
    pred = jax.nn.sigmoid(jax.random.normal(ks[0], (N, 1), dtype=jnp.float32))
    iou = jax.random.uniform(ks[1], (N,), dtype=jnp.float32)
    check(pred, iou, config, use_pallas=True)

    # Case 2: N=1000 (single block, masked tail), Pallas path, f32 inputs.
    N2 = 1000
    pred2 = jax.nn.sigmoid(jax.random.normal(ks[2], (N2, 1), dtype=jnp.float32))
    iou2 = jax.random.uniform(ks[3], (N2,), dtype=jnp.float32)
    check(pred2, iou2, config, use_pallas=True)

    # Case 2b: bf16 predictions (halves HBM bytes; kernel upcasts in VMEM).
    # iou kept f32 so threshold-exact behavior matches the reference.
    check(pred2.astype(jnp.bfloat16), iou2, config, use_pallas=True)

    # Case 3: multi-block grid with 2 parallel slices, interior fast-path
    # blocks, a masked tail block and a clamped duplicate block (small
    # block_rows to exercise the multi-block path at a small N).
    N3 = 40_000
    pred3 = jax.nn.sigmoid(jax.random.normal(ks[4], (N3, 1), dtype=jnp.float32))
    iou3 = jax.random.uniform(ks[5], (N3,), dtype=jnp.float32)
    check(pred3, iou3, config, block_rows=64)      # auto dispatch -> Pallas

    # Case 4: no sample selected -> loss must be exactly 0 (and not NaN).
    empty_cfg = {"positive_cls_lb": 2.0, "negative_cls_ub": -1.0}
    loss4 = jax.block_until_ready(
        classification_loss(pred, iou, empty_cfg, use_pallas=True))
    assert jnp.allclose(loss4, 0.0), loss4

    # Case 5: small-N auto dispatch -> fused pure-JAX fast path.
    check(pred2, iou2, config)

    print("KERNEL_OK")
</pallas_src>

<mosaic_0001>
module attributes {stable_mosaic.version = 11 : i64} {
  func.func @_cls_loss_kernel(%arg0: i32, %arg1: i32, %arg2: memref<8x128xf32, #tpu.memory_space<vmem>>, %arg3: memref<8x128xf32, #tpu.memory_space<vmem>>, %arg4: memref<1x8x128xf32, #tpu.memory_space<vmem>>, %arg5: memref<1x8x128xf32, #tpu.memory_space<vmem>>) attributes {dimension_semantics = [#tpu.dimension_semantics<parallel>, #tpu.dimension_semantics<arbitrary>], iteration_bounds = array<i64: 1, 1>, scalar_prefetch = 0 : i64, scratch_operands = 0 : i64, tpu.core_type = #tpu.core_type<tc>, window_params = [{transform_indices = @transform_0, window_bounds = array<i64: 8, 128>}, {transform_indices = @transform_1, window_bounds = array<i64: 8, 128>}, {transform_indices = @transform_2, window_bounds = array<i64: 1, 8, 128>}, {transform_indices = @transform_3, window_bounds = array<i64: 1, 8, 128>}]} {
    %c1_i32 = arith.constant 1 : i32
    %0 = arith.muli %arg0, %c1_i32 : i32
    %1 = arith.addi %0, %arg1 : i32
    %c0_i32 = arith.constant 0 : i32
    %2 = arith.cmpi eq, %arg1, %c0_i32 : i32
    %3 = arith.extui %2 : i1 to i32
    %c0_i32_0 = arith.constant 0 : i32
    %4 = arith.cmpi ne, %3, %c0_i32_0 : i32
    scf.if %4 {
      %cst = arith.constant 0.000000e+00 : f32
      %15 = vector.broadcast %cst : f32 to vector<1x8x128xf32>
      %c0_7 = arith.constant 0 : index
      %c0_8 = arith.constant 0 : index
      %c0_9 = arith.constant 0 : index
      %16 = vector.load %arg4[%c0_7, %c0_8, %c0_9] : memref<1x8x128xf32, #tpu.memory_space<vmem>>, vector<1x8x128xf32>
      tpu.vector_store %arg4[%c0_7, %c0_8, %c0_9], %15 {strides = array<i32>} : memref<1x8x128xf32, #tpu.memory_space<vmem>>, vector<1x8x128xf32>,
      %cst_10 = arith.constant 0.000000e+00 : f32
      %17 = vector.broadcast %cst_10 : f32 to vector<1x8x128xf32>
      %c0_11 = arith.constant 0 : index
      %c0_12 = arith.constant 0 : index
      %c0_13 = arith.constant 0 : index
      %18 = vector.load %arg5[%c0_11, %c0_12, %c0_13] : memref<1x8x128xf32, #tpu.memory_space<vmem>>, vector<1x8x128xf32>
      tpu.vector_store %arg5[%c0_11, %c0_12, %c0_13], %17 {strides = array<i32>} : memref<1x8x128xf32, #tpu.memory_space<vmem>>, vector<1x8x128xf32>,
    } else {
    }
    %c0 = arith.constant 0 : index
    %c0_1 = arith.constant 0 : index
    %5 = vector.load %arg2[%c0, %c0_1] : memref<8x128xf32, #tpu.memory_space<vmem>>, vector<8x128xf32>
    %c0_2 = arith.constant 0 : index
    %c0_3 = arith.constant 0 : index
    %6 = vector.load %arg3[%c0_2, %c0_3] : memref<8x128xf32, #tpu.memory_space<vmem>>, vector<8x128xf32>
    %c1_i32_4 = arith.constant 1 : i32
    %7 = arith.addi %1, %c1_i32_4 : i32
    %c1024_i32 = arith.constant 1024 : i32
    %8 = arith.muli %7, %c1024_i32 : i32
    %c16_i32 = arith.constant 16 : i32
    %9 = arith.cmpi sgt, %8, %c16_i32 : i32
    %true = arith.constant true
    %10 = arith.xori %9, %true : i1
    %11 = arith.extui %10 : i1 to i32
    %c0_i32_5 = arith.constant 0 : i32
    %12 = arith.cmpi ne, %11, %c0_i32_5 : i32
    scf.if %12 {
      %cst = arith.constant 6.000000e-01 : f32
      %15 = vector.broadcast %cst : f32 to vector<8x128xf32>
      %16 = arith.cmpf oge, %6, %15 : vector<8x128xf32>
      %cst_7 = arith.constant 4.500000e-01 : f32
      %17 = vector.broadcast %cst_7 : f32 to vector<8x128xf32>
      %18 = arith.cmpf ole, %6, %17 : vector<8x128xf32>
      %19 = arith.ori %16, %18 : vector<8x128xi1>
      %cst_8 = arith.constant 1.000000e+00 : f32
      %20 = vector.broadcast %cst_8 : f32 to vector<8x128xf32>
      %21 = arith.subf %20, %5 : vector<8x128xf32>
      %22 = arith.select %16, %5, %21 : vector<8x128xi1>, vector<8x128xf32>
      %23 = math.log %22 : vector<8x128xf32>
      %cst_9 = arith.constant -1.000000e+02 : f32
      %24 = vector.broadcast %cst_9 : f32 to vector<8x128xf32>
      %25 = arith.maximumf %23, %24 : vector<8x128xf32>
      %cst_10 = arith.constant 0.000000e+00 : f32
      %26 = vector.broadcast %cst_10 : f32 to vector<8x128xf32>
      %27 = arith.subf %26, %25 : vector<8x128xf32>
      %cst_11 = arith.constant 0.000000e+00 : f32
      %28 = vector.broadcast %cst_11 : f32 to vector<8x128xf32>
      %29 = arith.select %19, %27, %28 : vector<8x128xi1>, vector<8x128xf32>
      %cst_12 = arith.constant 1.000000e+00 : f32
      %cst_13 = arith.constant 0.000000e+00 : f32
      %30 = vector.broadcast %cst_12 : f32 to vector<8x128xf32>
      %31 = vector.broadcast %cst_13 : f32 to vector<8x128xf32>
      %32 = arith.select %19, %30, %31 : vector<8x128xi1>, vector<8x128xf32>
      %c0_14 = arith.constant 0 : index
      %c0_15 = arith.constant 0 : index
      %c0_16 = arith.constant 0 : index
      %33 = vector.load %arg4[%c0_14, %c0_15, %c0_16] : memref<1x8x128xf32, #tpu.memory_space<vmem>>, vector<1x8x128xf32>
      %34 = vector.shape_cast %29 : vector<8x128xf32> to vector<1x8x128xf32>
      %cst_17 = arith.constant dense<0.000000e+00> : vector<8x128xf32>
      %35 = vector.multi_reduction <add>, %34, %cst_17 [0] : vector<1x8x128xf32> to vector<8x128xf32>
      %36 = vector.shape_cast %35 : vector<8x128xf32> to vector<1x8x128xf32>
      %37 = arith.addf %33, %36 : vector<1x8x128xf32>
      %c0_18 = arith.constant 0 : index
      %c0_19 = arith.constant 0 : index
      %c0_20 = arith.constant 0 : index
      %38 = vector.load %arg4[%c0_18, %c0_19, %c0_20] : memref<1x8x128xf32, #tpu.memory_space<vmem>>, vector<1x8x128xf32>
      tpu.vector_store %arg4[%c0_18, %c0_19, %c0_20], %37 {strides = array<i32>} : memref<1x8x128xf32, #tpu.memory_space<vmem>>, vector<1x8x128xf32>,
      %c0_21 = arith.constant 0 : index
      %c0_22 = arith.constant 0 : index
      %c0_23 = arith.constant 0 : index
      %39 = vector.load %arg5[%c0_21, %c0_22, %c0_23] : memref<1x8x128xf32, #tpu.memory_space<vmem>>, vector<1x8x128xf32>
      %40 = vector.shape_cast %32 : vector<8x128xf32> to vector<1x8x128xf32>
      %cst_24 = arith.constant dense<0.000000e+00> : vector<8x128xf32>
      %41 = vector.multi_reduction <add>, %40, %cst_24 [0] : vector<1x8x128xf32> to vector<8x128xf32>
      %42 = vector.shape_cast %41 : vector<8x128xf32> to vector<1x8x128xf32>
      %43 = arith.addf %39, %42 : vector<1x8x128xf32>
      %c0_25 = arith.constant 0 : index
      %c0_26 = arith.constant 0 : index
      %c0_27 = arith.constant 0 : index
      %44 = vector.load %arg5[%c0_25, %c0_26, %c0_27] : memref<1x8x128xf32, #tpu.memory_space<vmem>>, vector<1x8x128xf32>
      tpu.vector_store %arg5[%c0_25, %c0_26, %c0_27], %43 {strides = array<i32>} : memref<1x8x128xf32, #tpu.memory_space<vmem>>, vector<1x8x128xf32>,
    } else {
    }
    %13 = arith.extui %9 : i1 to i32
    %c0_i32_6 = arith.constant 0 : i32
    %14 = arith.cmpi ne, %13, %c0_i32_6 : i32
    scf.if %14 {
      %15 = tpu.iota {dimensions = array<i32: 0>} : vector<8x128xi32>
      %16 = tpu.iota {dimensions = array<i32: 1>} : vector<8x128xi32>
      %c1024_i32_7 = arith.constant 1024 : i32
      %17 = arith.muli %1, %c1024_i32_7 : i32
      %c128_i32 = arith.constant 128 : i32
      %18 = vector.broadcast %c128_i32 : i32 to vector<8x128xi32>
      %19 = arith.muli %15, %18 : vector<8x128xi32>
      %20 = vector.broadcast %17 : i32 to vector<8x128xi32>
      %21 = arith.addi %20, %19 : vector<8x128xi32>
      %22 = arith.addi %21, %16 : vector<8x128xi32>
      %c16_i32_8 = arith.constant 16 : i32
      %23 = vector.broadcast %c16_i32_8 : i32 to vector<8x128xi32>
      %24 = arith.cmpi slt, %22, %23 : vector<8x128xi32>
      %cst = arith.constant 6.000000e-01 : f32
      %25 = vector.broadcast %cst : f32 to vector<8x128xf32>
      %26 = arith.cmpf oge, %6, %25 : vector<8x128xf32>
      %cst_9 = arith.constant 4.500000e-01 : f32
      %27 = vector.broadcast %cst_9 : f32 to vector<8x128xf32>
      %28 = arith.cmpf ole, %6, %27 : vector<8x128xf32>
      %29 = arith.andi %24, %26 : vector<8x128xi1>
      %30 = arith.andi %24, %28 : vector<8x128xi1>
      %31 = arith.ori %29, %30 : vector<8x128xi1>
      %cst_10 = arith.constant 1.000000e+00 : f32
      %32 = vector.broadcast %cst_10 : f32 to vector<8x128xf32>
      %33 = arith.subf %32, %5 : vector<8x128xf32>
      %34 = arith.select %29, %5, %33 : vector<8x128xi1>, vector<8x128xf32>
      %35 = math.log %34 : vector<8x128xf32>
      %cst_11 = arith.constant -1.000000e+02 : f32
      %36 = vector.broadcast %cst_11 : f32 to vector<8x128xf32>
      %37 = arith.maximumf %35, %36 : vector<8x128xf32>
      %cst_12 = arith.constant 0.000000e+00 : f32
      %38 = vector.broadcast %cst_12 : f32 to vector<8x128xf32>
      %39 = arith.subf %38, %37 : vector<8x128xf32>
      %cst_13 = arith.constant 0.000000e+00 : f32
      %40 = vector.broadcast %cst_13 : f32 to vector<8x128xf32>
      %41 = arith.select %31, %39, %40 : vector<8x128xi1>, vector<8x128xf32>
      %cst_14 = arith.constant 1.000000e+00 : f32
      %cst_15 = arith.constant 0.000000e+00 : f32
      %42 = vector.broadcast %cst_14 : f32 to vector<8x128xf32>
      %43 = vector.broadcast %cst_15 : f32 to vector<8x128xf32>
      %44 = arith.select %31, %42, %43 : vector<8x128xi1>, vector<8x128xf32>
      %c0_16 = arith.constant 0 : index
      %c0_17 = arith.constant 0 : index
      %c0_18 = arith.constant 0 : index
      %45 = vector.load %arg4[%c0_16, %c0_17, %c0_18] : memref<1x8x128xf32, #tpu.memory_space<vmem>>, vector<1x8x128xf32>
      %46 = vector.shape_cast %41 : vector<8x128xf32> to vector<1x8x128xf32>
      %cst_19 = arith.constant dense<0.000000e+00> : vector<8x128xf32>
      %47 = vector.multi_reduction <add>, %46, %cst_19 [0] : vector<1x8x128xf32> to vector<8x128xf32>
      %48 = vector.shape_cast %47 : vector<8x128xf32> to vector<1x8x128xf32>
      %49 = arith.addf %45, %48 : vector<1x8x128xf32>
      %c0_20 = arith.constant 0 : index
      %c0_21 = arith.constant 0 : index
      %c0_22 = arith.constant 0 : index
      %50 = vector.load %arg4[%c0_20, %c0_21, %c0_22] : memref<1x8x128xf32, #tpu.memory_space<vmem>>, vector<1x8x128xf32>
      tpu.vector_store %arg4[%c0_20, %c0_21, %c0_22], %49 {strides = array<i32>} : memref<1x8x128xf32, #tpu.memory_space<vmem>>, vector<1x8x128xf32>,
      %c0_23 = arith.constant 0 : index
      %c0_24 = arith.constant 0 : index
      %c0_25 = arith.constant 0 : index
      %51 = vector.load %arg5[%c0_23, %c0_24, %c0_25] : memref<1x8x128xf32, #tpu.memory_space<vmem>>, vector<1x8x128xf32>
      %52 = vector.shape_cast %44 : vector<8x128xf32> to vector<1x8x128xf32>
      %cst_26 = arith.constant dense<0.000000e+00> : vector<8x128xf32>
      %53 = vector.multi_reduction <add>, %52, %cst_26 [0] : vector<1x8x128xf32> to vector<8x128xf32>
      %54 = vector.shape_cast %53 : vector<8x128xf32> to vector<1x8x128xf32>
      %55 = arith.addf %51, %54 : vector<1x8x128xf32>
      %c0_27 = arith.constant 0 : index
      %c0_28 = arith.constant 0 : index
      %c0_29 = arith.constant 0 : index
      %56 = vector.load %arg5[%c0_27, %c0_28, %c0_29] : memref<1x8x128xf32, #tpu.memory_space<vmem>>, vector<1x8x128xf32>
      tpu.vector_store %arg5[%c0_27, %c0_28, %c0_29], %55 {strides = array<i32>} : memref<1x8x128xf32, #tpu.memory_space<vmem>>, vector<1x8x128xf32>,
    } else {
    }
    return
  }
  func.func @transform_0(%arg0: i32, %arg1: i32) -> (i32, i32) {
    %c1_i32 = arith.constant 1 : i32
    %0 = arith.muli %arg0, %c1_i32 : i32
    %1 = arith.addi %0, %arg1 : i32
    %c0_i32 = arith.constant 0 : i32
    %2 = arith.minsi %1, %c0_i32 : i32
    %c0_i32_0 = arith.constant 0 : i32
    %c0_i32_1 = arith.constant 0 : i32
    return %2, %c0_i32_0 : i32, i32
  }
  func.func @transform_1(%arg0: i32, %arg1: i32) -> (i32, i32) {
    %c1_i32 = arith.constant 1 : i32
    %0 = arith.muli %arg0, %c1_i32 : i32
    %1 = arith.addi %0, %arg1 : i32
    %c0_i32 = arith.constant 0 : i32
    %2 = arith.minsi %1, %c0_i32 : i32
    %c0_i32_0 = arith.constant 0 : i32
    %c0_i32_1 = arith.constant 0 : i32
    return %2, %c0_i32_0 : i32, i32
  }
  func.func @transform_2(%arg0: i32, %arg1: i32) -> (i32, i32, i32) {
    %c0_i32 = arith.constant 0 : i32
    %c0_i32_0 = arith.constant 0 : i32
    %c0_i32_1 = arith.constant 0 : i32
    return %arg0, %c0_i32, %c0_i32_0 : i32, i32, i32
  }
  func.func @transform_3(%arg0: i32, %arg1: i32) -> (i32, i32, i32) {
    %c0_i32 = arith.constant 0 : i32
    %c0_i32_0 = arith.constant 0 : i32
    %c0_i32_1 = arith.constant 0 : i32
    return %arg0, %c0_i32, %c0_i32_0 : i32, i32, i32
  }
}

</mosaic_0001>

<llo_original>
// kernel: tpu_custom_call.1
$region0: #{tpu_custom_call.1}
  #allocation0 [shape = 'u32[]', space=smem, size = 0x4, offset = 0x4, fixed_abs, tag = 'smem constant byte address 0x4 - core index']
  #allocation1 [shape = 'u32[144,128]{1,0:T(1,128)}', space=vmem, size = 0x12000, scoped, tag = 'internal scratch']
  %s0 = inlined_call_operand.hbm [shape: f32[8,128], index: 0, kind: input, shape index: {}]
  %s1 = inlined_call_operand.hbm [shape: f32[8,128], index: 1, kind: input, shape index: {}]
  %s2 = inlined_call_operand.hbm [shape: f32[1,8,128], index: 2, kind: output, shape index: {0}]
  %s3 = inlined_call_operand.hbm [shape: f32[1,8,128], index: 3, kind: output, shape index: {1}]
  %4 = xla_tuple %s2, %s3
  %s5 = sld [smem:[#allocation0]]
  $region46: #{tpu_custom_call.1} parent=0
    _
  %s7 = ssub.s32 1, %s5
  %s8 = scalar_select 0, %s7, %s5
  $region1: #{tpu_custom_call.1} parent=0
    #allocation2 [shape = 'u8[4096]{0}', space=vmem, size = 0x1000, scoped, tag = 'input window, operand 0, single buffered']
    #allocation3 [shape = 's32[1]{0}', space=sflag, size = 0x4, scoped, tag = 'scoped memory for tpu_custom_call.1']
    #allocation4 [shape = 's32[1]{0}', space=sflag, size = 0x4, scoped, tag = 'scoped memory for tpu_custom_call.1']
    #allocation5 [shape = 'u8[4096]{0}', space=vmem, size = 0x1000, scoped, tag = 'input window, operand 1, single buffered']
    #allocation6 [shape = 's32[1]{0}', space=sflag, size = 0x4, scoped, tag = 'scoped memory for tpu_custom_call.1']
    #allocation7 [shape = 'u8[4096]{0}', space=vmem, size = 0x1000, scoped, tag = 'output window, operand 0, single buffered']
    #allocation8 [shape = 'u8[4096]{0}', space=vmem, size = 0x1000, scoped, tag = 'output window, operand 1, single buffered']
    #allocation9 [shape = 's32[1]{0}', space=sflag, size = 0x4, scoped, tag = 'scoped memory for tpu_custom_call.1']
    %9 = vsyncpa [#allocation3], 0
    %10 = vsyncpa [#allocation6], 0
    %11 = vsyncpa [#allocation4], 0
    %12 = vsyncpa [#allocation9], 0
    // Predicated region
    $region2: #{tpu_custom_call.1} parent=1 // pred_check
      _
    $region3: #{tpu_custom_call.1} parent=1 // pred_check_branch
      %14 = sbr.rel (0) target = $region5
    $region4: #{tpu_custom_call.1} parent=1 // pred_region
      %s15 = sadd.s32 0, 0
      %p16 = scmp.lt.s32.totalorder %s15, 0
      %s17 = scalar_select %p16, %s15, 0
      %s19 = ssub.s32 128, 128
      %20 = vsyncadd [#allocation3], %s19
      %s21 = smul.addr %s17, 128
      %s22 = scalar_lea.hbm %s0, %s21
      %s24 = sshll.u32 [#allocation2], 4
      %s25 = int_to_ptr.vmem [resolvable:$true] %s24
      %27 = dma.hbm_to_vmem [thread:$0]  %s22, 128, %s25, [#allocation3]
    $region5: #{tpu_custom_call.1} parent=1 // pred_fallthru
      _
    // Predicated region
    $region6: #{tpu_custom_call.1} parent=1 // pred_check
      _
    $region7: #{tpu_custom_call.1} parent=1 // pred_check_branch
      %29 = sbr.rel (0) target = $region9
    $region8: #{tpu_custom_call.1} parent=1 // pred_region
      %s30 = sadd.s32 0, 0
      %p31 = scmp.lt.s32.totalorder %s30, 0
      %s32 = scalar_select %p31, %s30, 0
      %s34 = ssub.s32 128, 128
      %35 = vsyncadd [#allocation6], %s34
      %s36 = smul.addr %s32, 128
      %s37 = scalar_lea.hbm %s1, %s36
      %s39 = sshll.u32 [#allocation5], 4
      %s40 = int_to_ptr.vmem [resolvable:$true] %s39
      %42 = dma.hbm_to_vmem [thread:$0]  %s37, 128, %s40, [#allocation6]
    $region9: #{tpu_custom_call.1} parent=1 // pred_fallthru
      _
    // Predicated region
    $region10: #{tpu_custom_call.1} parent=1 // pred_check
      _
    $region11: #{tpu_custom_call.1} parent=1 // pred_check_branch
      %44 = sbr.rel (0) target = $region13
    $region12: #{tpu_custom_call.1} parent=1 // pred_region
      %45 = dma.done [#allocation3], 128
    $region13: #{tpu_custom_call.1} parent=1 // pred_fallthru
      _
    // Predicated region
    $region14: #{tpu_custom_call.1} parent=1 // pred_check
      _
    $region15: #{tpu_custom_call.1} parent=1 // pred_check_branch
      %47 = sbr.rel (0) target = $region17
    $region16: #{tpu_custom_call.1} parent=1 // pred_region
      %48 = dma.done [#allocation6], 128
    $region17: #{tpu_custom_call.1} parent=1 // pred_fallthru
      _
    %s49 = sadd.s32 0, 0
    %p50 = scmp.lt.s32.totalorder %s49, 0
    %s51 = scalar_select %p50, %s49, 0
    %s52 = sadd.s32 0, 0
    %p53 = scmp.lt.s32.totalorder %s52, 0
    %s54 = scalar_select %p53, %s52, 0
    %s55 = sadd.s32 0, 0
    %p56 = scmp.eq.s32.totalorder 0, 0
    // Predicated region
    $region18: #{tpu_custom_call.1} parent=1 // pred_check
      %p57 = pneg %p56
    $region19: #{tpu_custom_call.1} parent=1 // pred_check_branch
      %59 = sbr.rel (%p57) target = $region21
    $region20: #{tpu_custom_call.1} parent=1 // pred_region
      %60 = vst [vmem:[#allocation7] sm:$0xff] 0.0
      %61 = vst [vmem:[#allocation8] sm:$0xff] 0.0
    $region21: #{tpu_custom_call.1} parent=1 // pred_fallthru
      _
    %v62 = vld [vmem:[#allocation2] sm:$0xff]
    %v63 = vld [vmem:[#allocation5] sm:$0xff]
    %s64 = sadd.s32 %s55, 1
    %s65 = smul.u32 %s64, 1024
    %p66 = scmp.gt.s32.totalorder %s65, 16
    %p67 = scmp.le.s32.totalorder %s65, 16
    // Predicated region
    $region22: #{tpu_custom_call.1} parent=1 // pred_check
      %p68 = pneg %p67
    $region23: #{tpu_custom_call.1} parent=1 // pred_check_branch
      %70 = sbr.rel (%p68) target = $region25
    $region24: #{tpu_custom_call.1} parent=1 // pred_region
      %vm71 = vcmp.ge.f32.partialorder %v63, 0.6
      %vm72 = vcmp.le.f32.partialorder %v63, 0.45
      %vm73 = vmor %vm71, %vm72
      %v74 = vsub.f32 1.0, %v62
      %v75 = vsel %vm71, %v62, %v74
      %v76 = vlog2.pop %v75
      %v77 = vmul.f32 %v76, 0.6931472
      %v78 = vmax.f32 %v77, -100.0
      %v79 = vsub.f32 0.0, %v78
      %v80 = vsel %vm73, %v79, 0.0
      %v81 = vsel %vm73, 1.0, 0.0
      %v82 = vld [vmem:[#allocation7] sm:$0xff]
      %v83 = vadd.f32 %v80, 0.0
      %v84 = vadd.f32 %v82, %v83
      %85 = vst [vmem:[#allocation7] sm:$0xff] %v84
      %v86 = vld [vmem:[#allocation8] sm:$0xff]
      %v87 = vadd.f32 %v81, 0.0
      %v88 = vadd.f32 %v86, %v87
      %89 = vst [vmem:[#allocation8] sm:$0xff] %v88
    $region25: #{tpu_custom_call.1} parent=1 // pred_fallthru
      _
    // Predicated region
    $region26: #{tpu_custom_call.1} parent=1 // pred_check
      %p90 = pneg %p66
    $region27: #{tpu_custom_call.1} parent=1 // pred_check_branch
      %92 = sbr.rel (%p90) target = $region29
    $region28: #{tpu_custom_call.1} parent=1 // pred_region
      %v93 = vlaneseq
      %v94 = vshrl.u32 %v93, 7
      %v95 = vlaneseq
      %v96 = vand.u32 %v95, 127
      %s97 = smul.u32 %s55, 1024
      %v98 = vmul.u32 %v94, 128
      %v99 = vstv %s97
      %v100 = vadd.s32 %v99, %v98
      %v101 = vadd.s32 %v100, %v96
      %vm102 = vcmp.lt.s32.totalorder %v101, 16
      %vm103 = vcmp.ge.f32.partialorder %v63, 0.6
      %vm104 = vcmp.le.f32.partialorder %v63, 0.45
      %vm105 = vmand %vm102, %vm103
      %vm106 = vmand %vm102, %vm104
      %vm107 = vmor %vm105, %vm106
      %v108 = vsub.f32 1.0, %v62
      %v109 = vsel %vm105, %v62, %v108
      %v110 = vlog2.pop %v109
      %v111 = vmul.f32 %v110, 0.6931472
      %v112 = vmax.f32 %v111, -100.0
      %v113 = vsub.f32 0.0, %v112
      %v114 = vsel %vm107, %v113, 0.0
      %v115 = vsel %vm107, 1.0, 0.0
      %v116 = vld [vmem:[#allocation7] sm:$0xff]
      %v117 = vadd.f32 %v114, 0.0
      %v118 = vadd.f32 %v116, %v117
      %119 = vst [vmem:[#allocation7] sm:$0xff] %v118
      %v120 = vld [vmem:[#allocation8] sm:$0xff]
      %v121 = vadd.f32 %v115, 0.0
      %v122 = vadd.f32 %v120, %v121
      %123 = vst [vmem:[#allocation8] sm:$0xff] %v122
    $region29: #{tpu_custom_call.1} parent=1 // pred_fallthru
      _
    // Predicated region
    $region30: #{tpu_custom_call.1} parent=1 // pred_check
      _
    $region31: #{tpu_custom_call.1} parent=1 // pred_check_branch
      %125 = sbr.rel (0) target = $region33
    $region32: #{tpu_custom_call.1} parent=1 // pred_region
      %s127 = ssub.s32 128, 128
      %128 = vsyncadd [#allocation4], %s127
      %s130 = sshll.u32 [#allocation7], 4
      %s131 = int_to_ptr.vmem [resolvable:$true] %s130
      %133 = dma.vmem_to_hbm [thread:$0]  %s131, 128, %s2, [#allocation4]
    $region33: #{tpu_custom_call.1} parent=1 // pred_fallthru
      _
    // Predicated region
    $region34: #{tpu_custom_call.1} parent=1 // pred_check
      _
    $region35: #{tpu_custom_call.1} parent=1 // pred_check_branch
      %135 = sbr.rel (0) target = $region37
    $region36: #{tpu_custom_call.1} parent=1 // pred_region
      %s137 = ssub.s32 128, 128
      %138 = vsyncadd [#allocation9], %s137
      %s140 = sshll.u32 [#allocation8], 4
      %s141 = int_to_ptr.vmem [resolvable:$true] %s140
      %143 = dma.vmem_to_hbm [thread:$0]  %s141, 128, %s3, [#allocation9]
    $region37: #{tpu_custom_call.1} parent=1 // pred_fallthru
      _
    // Predicated region
    $region38: #{tpu_custom_call.1} parent=1 // pred_check
      _
    $region39: #{tpu_custom_call.1} parent=1 // pred_check_branch
      %145 = sbr.rel (0) target = $region41
    $region40: #{tpu_custom_call.1} parent=1 // pred_region
      %146 = dma.done [#allocation4], 128
    $region41: #{tpu_custom_call.1} parent=1 // pred_fallthru
      _
    // Predicated region
    $region42: #{tpu_custom_call.1} parent=1 // pred_check
      _
    $region43: #{tpu_custom_call.1} parent=1 // pred_check_branch
      %148 = sbr.rel (0) target = $region45
    $region44: #{tpu_custom_call.1} parent=1 // pred_region
      %149 = dma.done [#allocation9], 128
    $region45: #{tpu_custom_call.1} parent=1 // pred_fallthru
      _
    %150 = vsyncpa [#allocation3], 1
    %151 = vsyncpa [#allocation6], 1
    %152 = vsyncpa [#allocation4], 1
    %153 = vsyncpa [#allocation9], 1

</llo_original>
